<compile_context>
chip_gen: v7x
topology: tpu7x:2x2x1
jax: 0.10.0
libtpu: 0.0.40
codegen_flags: <defaults>
</compile_context>

<pallas_src>
import functools

import jax
import jax.numpy as jnp
from jax.experimental import pallas as pl
from jax.experimental.pallas import tpu as pltpu


def _round_up(n, m):
    return ((n + m - 1) // m) * m


def _pad2(a, rows, cols):
    return jnp.pad(a, ((0, rows - a.shape[0]), (0, cols - a.shape[1])))


def _vmem_budget_bytes():
    """Generation-aware VMEM tiling budget (~3/4 of per-TC capacity).
    v7x: ~48 MiB of 64 MiB; v5e/v6e: ~96 MiB of 128 MiB."""
    cap = 64 << 20  # conservative fallback: v7x per-TC physical VMEM
    try:
        info_fn = getattr(pltpu, "get_tpu_info", None)
        if info_fn is not None:
            cap = int(info_fn().vmem_capacity_bytes)
    except Exception:
        pass
    return (cap * 3) // 4


# ----------------------------------------------------------------------------
# Pallas kernel
# ----------------------------------------------------------------------------
def make_projector_kernel(num_hidden_layers: int):
    """Ref order:
      z_ref    (Bt, Kp)        fused [conv|stats] activation slab (compute dtype)
      w1_ref   (Kp, H0p)       fused first Linear (compute dtype)
      b1_ref   (1,  H0p)       f32 bias
      [w_i (H_{i-1}p, H_ip), b_i (1, H_ip)] * (num_hidden_layers - 1)
      w_out    (Hlastp, OUT)   final Linear (no bias), unpadded output columns
      y_ref    (Bt, OUT)       f32 output
    """

    def kernel(*refs):
        z_ref, w1_ref, b1_ref = refs[0], refs[1], refs[2]
        y_ref = refs[-1]

        # First layer: ONE lane-dense MXU pass over the fused [conv(x) | stats]
        # slab (conv already folded / precomputed), f32 accumulation, f32 bias.
        h = jnp.dot(z_ref[...], w1_ref[...],
                    preferred_element_type=jnp.float32) + b1_ref[...]
        h = jnp.maximum(h, 0.0)

        # Remaining hidden Linear+ReLU layers (bf16 MXU inputs, f32 accumulate).
        idx = 3
        for _ in range(num_hidden_layers - 1):
            w_ref, b_ref = refs[idx], refs[idx + 1]
            idx += 2
            h = jnp.maximum(
                jnp.dot(h.astype(w_ref.dtype), w_ref[...],
                        preferred_element_type=jnp.float32) + b_ref[...],
                0.0)

        # Final Linear (no bias). Output columns are NOT lane-padded: with a tiny
        # out_dim the masked store is far cheaper than a 128-wide padded
        # writeback + wrapper slice.
        w_out_ref = refs[idx]
        y_ref[...] = jnp.dot(h.astype(w_out_ref.dtype), w_out_ref[...],
                             preferred_element_type=jnp.float32).astype(y_ref.dtype)

    return kernel


# ----------------------------------------------------------------------------
# One-time parameter preprocessing (hoisted out of the per-call path)
# ----------------------------------------------------------------------------
def prepare_projector_params(params, seq_len, enc_in, lane=128,
                             compute_dtype=jnp.bfloat16):
    S, E = seq_len, enc_in
    conv_w = params["conv_w"].astype(jnp.float32)            # (1, S, K)
    lin_ws = [w.astype(jnp.float32) for w in params["lin_ws"]]
    lin_bs = [b.astype(jnp.float32) for b in params["lin_bs"]]
    num_hidden = len(lin_bs)
    out_dim = lin_ws[-1].shape[0]
    K = conv_w.shape[-1]

    w1_t = lin_ws[0].T                                        # (2E, H0)
    w1a, w1b = w1_t[:E], w1_t[E:]                             # conv part / stats part
    H0 = w1a.shape[1]

    hdims = [w.shape[0] for w in lin_ws[:num_hidden]]
    hpads = [_round_up(h, lane) for h in hdims]

    budget = _vmem_budget_bytes()
    cd_size = jnp.dtype(compute_dtype).itemsize
    kp_fold = _round_up(S * E + E, lane)
    # Folded first-layer weight is S x bigger than the unfolded one; only fold
    # when it (double-buffered) takes at most ~1/4 of the per-TC VMEM budget.
    fold = (2 * kp_fold * hpads[0] * cd_size) <= budget // 4

    if fold:
        # Fold circular conv into the first Linear without materializing the
        # (S*E, E) circulant:
        #   W1a_eff[c*E + j, h] = sum_k conv_w[0,c,k] * w1a[(j+1-k) % E, h]
        w1a_eff = jnp.zeros((S, E, H0), dtype=jnp.float32)
        for k in range(K):
            rolled = jnp.roll(w1a, shift=k - 1, axis=0)       # rolled[j] = w1a[(j+1-k)%E]
            w1a_eff = w1a_eff + conv_w[0, :, k][:, None, None] * rolled[None, :, :]
        w1_first = jnp.concatenate([w1a_eff.reshape(S * E, H0), w1b], axis=0)
        k_in = S * E + E
    else:
        # Folded weight would blow per-TC VMEM at realistic DishTS sizes: keep the
        # (tiny) circular conv as a plain-JAX op in the wrapper, kernel runs the MLP.
        w1_first = jnp.concatenate([w1a, w1b], axis=0)        # (2E, H0)
        k_in = 2 * E
    kp = _round_up(k_in, lane)                                # lane-dense contraction

    # Lane-dense padding (exact: zero rows/cols and ReLU(0)=0). Weights -> bf16,
    # biases stay f32 (added after f32 MXU accumulation).
    weights = [_pad2(w1_first, kp, hpads[0]).astype(compute_dtype),
               _pad2(lin_bs[0].reshape(1, -1), 1, hpads[0])]
    for i in range(1, num_hidden):
        weights.append(_pad2(lin_ws[i].T, hpads[i - 1], hpads[i]).astype(compute_dtype))
        weights.append(_pad2(lin_bs[i].reshape(1, -1), 1, hpads[i]))
    weights.append(_pad2(lin_ws[-1].T, hpads[-1], out_dim).astype(compute_dtype))
    weights = tuple(jax.device_put(w) for w in weights)

    weight_bytes = sum(int(w.size) * w.dtype.itemsize for w in weights)
    return {
        "weights": weights,
        "num_hidden": num_hidden,
        "out_dim": out_dim,
        "kp": kp,
        "k_in": k_in,
        "fold": fold,
        "conv_w": jax.device_put(conv_w),
        "max_hpad": max(hpads),
        "weight_bytes": weight_bytes,
        "compute_dtype": compute_dtype,
        "vmem_budget": budget,
        "seq_len": S,
        "enc_in": E,
    }


# ----------------------------------------------------------------------------
# Per-call wrapper + pallas_call
# ----------------------------------------------------------------------------
def _choose_b_tile(B, row_bytes, resident_bytes, budget):
    """Largest MXU-friendly batch tile such that resident (2x-buffered) weights plus
    streamed activation tiles fit the generation-aware VMEM budget."""
    avail = max(budget - resident_bytes, 1 << 20)
    # Floor of 8 rows (sublane minimum); at production S*E the fold guard keeps
    # the per-row footprint small, so this floor cannot meaningfully overshoot.
    bt = max(avail // max(row_bytes, 1), 8)
    # Force >=2 grid steps when possible so the "parallel" batch axis shards
    # across both v7x TensorCores (costs one ~0.35us extra step on v5e/v6e).
    if B >= 16:
        bt = min(bt, pl.cdiv(B, 2))
    bt = min(bt, B)
    if bt < B:
        if bt >= 256:
            bt = (bt // 256) * 256        # aligned to v6e/v7x 256-wide MXU M cadence
        elif bt >= 128:
            bt = 128
        else:
            bt = max(8, (bt // 8) * 8)    # partial tiles must keep sublane dim % 8
    return int(bt)


@functools.partial(jax.jit, static_argnames=("num_hidden", "out_dim", "b_tile"))
def _projector_call(z, weights, *, num_hidden, out_dim, b_tile):
    B, Kp = z.shape
    grid = (pl.cdiv(B, b_tile),)

    in_specs = [pl.BlockSpec((b_tile, Kp), lambda i: (i, 0))]
    # Constant-index weights: fetched once, VMEM-resident across all grid steps.
    # (BlockSpec inputs are double-buffered by default, so they are counted at 2x
    # in the footprint math below.)
    in_specs += [pl.BlockSpec(w.shape, lambda i: (0, 0)) for w in weights]
    out_specs = pl.BlockSpec((b_tile, out_dim), lambda i: (i, 0))

    weight_bytes = sum(int(w.size) * w.dtype.itemsize for w in weights)
    max_hpad = max(w.shape[1] for w in weights[:-1])
    resident = 2 * weight_bytes                              # default double-buffering
    act = 2 * b_tile * (Kp * z.dtype.itemsize + out_dim * 4)  # streamed in/out tiles
    interm = 3 * b_tile * max_hpad * 4                        # live f32 intermediates
    budget = _vmem_budget_bytes()
    vmem_limit = int(min(max(resident + act + interm + (8 << 20), 16 << 20),
                         budget + budget // 6))               # <= ~7/8 of per-TC VMEM

    return pl.pallas_call(
        make_projector_kernel(num_hidden),
        out_shape=jax.ShapeDtypeStruct((B, out_dim), jnp.float32),
        grid=grid,
        in_specs=in_specs,
        out_specs=out_specs,
        compiler_params=pltpu.CompilerParams(
            dimension_semantics=("parallel",),   # batch grid shards across v7x's 2 TCs
            vmem_limit_bytes=vmem_limit),
    )(z, *weights)


def projector_forward(x, stats, prepared):
    """x: (B, S, E), stats: (B, 1, E). Returns (B, output_dim) f32."""
    B, S, E = x.shape
    cd = prepared["compute_dtype"]
    st = stats.reshape(B, E).astype(jnp.float32)

    if prepared["fold"]:
        first = x.reshape(B, S * E).astype(jnp.float32)
    else:
        # Conv kept outside the kernel (tiny: B*E*S*K MACs); see the fold guard in
        # prepare_projector_params.
        conv_w = prepared["conv_w"]
        K = conv_w.shape[-1]
        first = jnp.zeros((B, E), dtype=jnp.float32)
        for k in range(K):
            first = first + jnp.einsum(
                "bce,c->be",
                jnp.roll(x, shift=1 - k, axis=-1).astype(jnp.float32),
                conv_w[0, :, k])

    # Fused, lane-dense, bf16 activation slab: [conv-part | stats | zero pad].
    z = jnp.concatenate([first, st], axis=-1)
    kp = prepared["kp"]
    if z.shape[1] < kp:
        z = jnp.pad(z, ((0, 0), (0, kp - z.shape[1])))
    z = z.astype(cd)

    row_bytes = (2 * kp * jnp.dtype(cd).itemsize       # double-buffered z tile
                 + 2 * prepared["out_dim"] * 4         # double-buffered out tile
                 + 3 * prepared["max_hpad"] * 4)       # f32 intermediates
    b_tile = _choose_b_tile(B, row_bytes, 2 * prepared["weight_bytes"],
                            prepared["vmem_budget"])
    return _projector_call(z, prepared["weights"],
                           num_hidden=prepared["num_hidden"],
                           out_dim=prepared["out_dim"],
                           b_tile=b_tile)


# ----------------------------------------------------------------------------
# Pure-JAX f32 reference (verification only)
# ----------------------------------------------------------------------------
def projector_reference(x, stats, params):
    conv_w = params["conv_w"]
    B, S, E = x.shape
    conv = jnp.zeros((B, E), dtype=jnp.float32)
    for k in range(conv_w.shape[-1]):
        xs = jnp.roll(x, shift=1 - k, axis=-1)
        conv = conv + jnp.einsum("bce,c->be", xs, conv_w[0, :, k])
    h = jnp.concatenate([conv, stats[:, 0, :]], axis=-1)
    lin_ws, lin_bs = params["lin_ws"], params["lin_bs"]
    for i in range(len(lin_bs)):
        h = jnp.maximum(h @ lin_ws[i].T + lin_bs[i], 0.0)
    return h @ lin_ws[-1].T


# ----------------------------------------------------------------------------
# Main
# ----------------------------------------------------------------------------
if __name__ == "__main__":
    # Module config (small, consistent with __init__)
    B, seq_len, enc_in = 2, 8, 4
    hidden_dims = [32, 32]
    hidden_layers = 2
    output_dim = 4

    # Deterministic synthetic parameters
    pkey = jax.random.PRNGKey(42)
    k_conv, k_w1, k_b1, k_w2, k_b2, k_w3 = jax.random.split(pkey, 6)
    params = {
        "conv_w": 0.1 * jax.random.normal(k_conv, (1, seq_len, 3), dtype=jnp.float32),
        "lin_ws": [
            0.1 * jax.random.normal(k_w1, (hidden_dims[0], 2 * enc_in), dtype=jnp.float32),
            0.1 * jax.random.normal(k_w2, (hidden_dims[1], hidden_dims[0]), dtype=jnp.float32),
            0.1 * jax.random.normal(k_w3, (output_dim, hidden_dims[1]), dtype=jnp.float32),
        ],
        "lin_bs": [
            0.01 * jax.random.normal(k_b1, (hidden_dims[0],), dtype=jnp.float32),
            0.01 * jax.random.normal(k_b2, (hidden_dims[1],), dtype=jnp.float32),
        ],
    }
    assert hidden_layers == len(params["lin_bs"])

    # One-time preprocessing (parameter-load time, NOT per call)
    prepared = prepare_projector_params(params, seq_len, enc_in)

    # Deterministic example inputs
    ikey = jax.random.PRNGKey(0)
    kx, ks = jax.random.split(ikey)
    x = jax.random.normal(kx, (B, seq_len, enc_in), dtype=jnp.float32)
    stats = jax.random.normal(ks, (B, 1, enc_in), dtype=jnp.float32)

    y = projector_forward(x, stats, prepared)
    y = jax.block_until_ready(y)

    y_ref = projector_reference(x, stats, params)
    assert y.shape == (B, output_dim)
    # bf16 MXU inputs with f32 accumulation -> bf16-appropriate tolerance.
    assert jnp.allclose(y, y_ref, atol=2e-2, rtol=2e-2), (y, y_ref)

    print("KERNEL_OK")
</pallas_src>

<mosaic_0001>
module attributes {stable_mosaic.version = 11 : i64} {
  func.func @kernel(%arg0: i32, %arg1: memref<2x128xbf16, #tpu.memory_space<vmem>>, %arg2: memref<128x128xbf16, #tpu.memory_space<vmem>>, %arg3: memref<1x128xf32, #tpu.memory_space<vmem>>, %arg4: memref<128x128xbf16, #tpu.memory_space<vmem>>, %arg5: memref<1x128xf32, #tpu.memory_space<vmem>>, %arg6: memref<128x4xbf16, #tpu.memory_space<vmem>>, %arg7: memref<2x4xf32, #tpu.memory_space<vmem>>) attributes {dimension_semantics = [#tpu.dimension_semantics<parallel>], iteration_bounds = array<i64: 1>, scalar_prefetch = 0 : i64, scratch_operands = 0 : i64, tpu.core_type = #tpu.core_type<tc>, window_params = [{transform_indices = @transform_0, window_bounds = array<i64: 2, 128>}, {pipeline_mode = #tpu.pipeline_mode<synchronous>, transform_indices = @transform_1, window_bounds = array<i64: 128, 128>}, {pipeline_mode = #tpu.pipeline_mode<synchronous>, transform_indices = @transform_2, window_bounds = array<i64: 1, 128>}, {pipeline_mode = #tpu.pipeline_mode<synchronous>, transform_indices = @transform_3, window_bounds = array<i64: 128, 128>}, {pipeline_mode = #tpu.pipeline_mode<synchronous>, transform_indices = @transform_4, window_bounds = array<i64: 1, 128>}, {pipeline_mode = #tpu.pipeline_mode<synchronous>, transform_indices = @transform_5, window_bounds = array<i64: 128, 4>}, {transform_indices = @transform_6, window_bounds = array<i64: 2, 4>}]} {
    %c0 = arith.constant 0 : index
    %c0_0 = arith.constant 0 : index
    %0 = vector.load %arg1[%c0, %c0_0] : memref<2x128xbf16, #tpu.memory_space<vmem>>, vector<2x128xbf16>
    %c0_1 = arith.constant 0 : index
    %c0_2 = arith.constant 0 : index
    %1 = vector.load %arg2[%c0_1, %c0_2] : memref<128x128xbf16, #tpu.memory_space<vmem>>, vector<128x128xbf16>
    %cst = arith.constant dense<0.000000e+00> : vector<2x128xf32>
    %2 = tpu.matmul %0, %1, %cst {dimension_numbers = #tpu.dot_dimension_numbers<[1], [0], [0], [1], [0, 0, 1, 1], [], []>} : vector<2x128xbf16>, vector<128x128xbf16>, vector<2x128xf32> -> vector<2x128xf32>
    %c0_3 = arith.constant 0 : index
    %c0_4 = arith.constant 0 : index
    %3 = vector.load %arg3[%c0_3, %c0_4] : memref<1x128xf32, #tpu.memory_space<vmem>>, vector<1x128xf32>
    %4 = vector.broadcast %3 : vector<1x128xf32> to vector<2x128xf32>
    %5 = arith.addf %2, %4 : vector<2x128xf32>
    %cst_5 = arith.constant 0.000000e+00 : f32
    %6 = vector.broadcast %cst_5 : f32 to vector<2x128xf32>
    %7 = arith.maximumf %5, %6 : vector<2x128xf32>
    %8 = arith.truncf %7 : vector<2x128xf32> to vector<2x128xbf16>
    %c0_6 = arith.constant 0 : index
    %c0_7 = arith.constant 0 : index
    %9 = vector.load %arg4[%c0_6, %c0_7] : memref<128x128xbf16, #tpu.memory_space<vmem>>, vector<128x128xbf16>
    %cst_8 = arith.constant dense<0.000000e+00> : vector<2x128xf32>
    %10 = tpu.matmul %8, %9, %cst_8 {dimension_numbers = #tpu.dot_dimension_numbers<[1], [0], [0], [1], [0, 0, 1, 1], [], []>} : vector<2x128xbf16>, vector<128x128xbf16>, vector<2x128xf32> -> vector<2x128xf32>
    %c0_9 = arith.constant 0 : index
    %c0_10 = arith.constant 0 : index
    %11 = vector.load %arg5[%c0_9, %c0_10] : memref<1x128xf32, #tpu.memory_space<vmem>>, vector<1x128xf32>
    %12 = vector.broadcast %11 : vector<1x128xf32> to vector<2x128xf32>
    %13 = arith.addf %10, %12 : vector<2x128xf32>
    %cst_11 = arith.constant 0.000000e+00 : f32
    %14 = vector.broadcast %cst_11 : f32 to vector<2x128xf32>
    %15 = arith.maximumf %13, %14 : vector<2x128xf32>
    %16 = arith.truncf %15 : vector<2x128xf32> to vector<2x128xbf16>
    %c0_12 = arith.constant 0 : index
    %c0_13 = arith.constant 0 : index
    %17 = vector.load %arg6[%c0_12, %c0_13] : memref<128x4xbf16, #tpu.memory_space<vmem>>, vector<128x4xbf16>
    %cst_14 = arith.constant dense<0.000000e+00> : vector<2x4xf32>
    %18 = tpu.matmul %16, %17, %cst_14 {dimension_numbers = #tpu.dot_dimension_numbers<[1], [0], [0], [1], [0, 0, 1, 1], [], []>} : vector<2x128xbf16>, vector<128x4xbf16>, vector<2x4xf32> -> vector<2x4xf32>
    %c0_15 = arith.constant 0 : index
    %c0_16 = arith.constant 0 : index
    %19 = vector.load %arg7[%c0_15, %c0_16] : memref<2x4xf32, #tpu.memory_space<vmem>>, vector<2x4xf32>
    tpu.vector_store %arg7[%c0_15, %c0_16], %18 {strides = array<i32>} : memref<2x4xf32, #tpu.memory_space<vmem>>, vector<2x4xf32>,
    return
  }
  func.func @transform_0(%arg0: i32) -> (i32, i32) {
    %c0_i32 = arith.constant 0 : i32
    %c0_i32_0 = arith.constant 0 : i32
    return %arg0, %c0_i32 : i32, i32
  }
  func.func @transform_1(%arg0: i32) -> (i32, i32) {
    %c0_i32 = arith.constant 0 : i32
    %c0_i32_0 = arith.constant 0 : i32
    %c0_i32_1 = arith.constant 0 : i32
    return %c0_i32, %c0_i32_0 : i32, i32
  }
  func.func @transform_2(%arg0: i32) -> (i32, i32) {
    %c0_i32 = arith.constant 0 : i32
    %c0_i32_0 = arith.constant 0 : i32
    %c0_i32_1 = arith.constant 0 : i32
    return %c0_i32, %c0_i32_0 : i32, i32
  }
  func.func @transform_3(%arg0: i32) -> (i32, i32) {
    %c0_i32 = arith.constant 0 : i32
    %c0_i32_0 = arith.constant 0 : i32
    %c0_i32_1 = arith.constant 0 : i32
    return %c0_i32, %c0_i32_0 : i32, i32
  }
  func.func @transform_4(%arg0: i32) -> (i32, i32) {
    %c0_i32 = arith.constant 0 : i32
    %c0_i32_0 = arith.constant 0 : i32
    %c0_i32_1 = arith.constant 0 : i32
    return %c0_i32, %c0_i32_0 : i32, i32
  }
  func.func @transform_5(%arg0: i32) -> (i32, i32) {
    %c0_i32 = arith.constant 0 : i32
    %c0_i32_0 = arith.constant 0 : i32
    %c0_i32_1 = arith.constant 0 : i32
    return %c0_i32, %c0_i32_0 : i32, i32
  }
  func.func @transform_6(%arg0: i32) -> (i32, i32) {
    %c0_i32 = arith.constant 0 : i32
    %c0_i32_0 = arith.constant 0 : i32
    return %arg0, %c0_i32 : i32, i32
  }
}

</mosaic_0001>

<llo_original>
// kernel: _projector_call.1
$region0: #{_projector_call.1}
  #allocation0 [shape = 'u32[]', space=smem, size = 0x4, offset = 0x4, fixed_abs, tag = 'smem constant byte address 0x4 - core index']
  #allocation1 [shape = 'u32[144,128]{1,0:T(1,128)}', space=vmem, size = 0x12000, scoped, tag = 'internal scratch']
  %s0 = inlined_call_operand.vmem [shape: bf16[2,128], index: 0, kind: input, shape index: {}]
  %s1 = inlined_call_operand.vmem [shape: bf16[128,128], index: 1, kind: input, shape index: {}]
  %s2 = inlined_call_operand.vmem [shape: f32[1,128], index: 2, kind: input, shape index: {}]
  %s3 = inlined_call_operand.hbm [shape: bf16[128,128], index: 3, kind: input, shape index: {}]
  %s4 = inlined_call_operand.vmem [shape: f32[1,128], index: 4, kind: input, shape index: {}]
  %s5 = inlined_call_operand.vmem [shape: bf16[128,4], index: 5, kind: input, shape index: {}]
  %s6 = inlined_call_operand.hbm [shape: f32[2,4], index: 6, kind: output, shape index: {}]
  %s7 = sld [smem:[#allocation0]]
  $region38: #{_projector_call.1} parent=0
    _
  %s9 = ssub.s32 1, %s7
  %s10 = scalar_select 0, %s9, %s7
  $region1: #{_projector_call.1} parent=0
    #allocation2 [shape = 'u8[32768]{0}', space=vmem, size = 0x8000, scoped, tag = 'input window, operand 3, single buffered']
    #allocation3 [shape = 's32[1]{0}', space=sflag, size = 0x4, scoped, tag = 'scoped memory for _projector_call.1']
    #allocation4 [shape = 's32[1]{0}', space=sflag, size = 0x4, scoped, tag = 'scoped memory for _projector_call.1']
    #allocation5 [shape = 'u8[1024]{0}', space=vmem, size = 0x400, scoped, tag = 'output window, operand 0, single buffered']
    %11 = vsyncpa [#allocation3], 0
    %12 = vsyncpa [#allocation4], 0
    // Predicated region
    $region2: #{_projector_call.1} parent=1 // pred_check
      _
    $region3: #{_projector_call.1} parent=1 // pred_check_branch
      %14 = sbr.rel (0) target = $region5
    $region4: #{_projector_call.1} parent=1 // pred_region
      _
    $region5: #{_projector_call.1} parent=1 // pred_fallthru
      _
    // Predicated region
    $region6: #{_projector_call.1} parent=1 // pred_check
      _
    $region7: #{_projector_call.1} parent=1 // pred_check_branch
      %16 = sbr.rel (0) target = $region9
    $region8: #{_projector_call.1} parent=1 // pred_region
      _
    $region9: #{_projector_call.1} parent=1 // pred_fallthru
      _
    // Predicated region
    $region10: #{_projector_call.1} parent=1 // pred_check
      _
    $region11: #{_projector_call.1} parent=1 // pred_check_branch
      %18 = sbr.rel (0) target = $region13
    $region12: #{_projector_call.1} parent=1 // pred_region
      _
    $region13: #{_projector_call.1} parent=1 // pred_fallthru
      _
    // Predicated region
    $region14: #{_projector_call.1} parent=1 // pred_check
      _
    $region15: #{_projector_call.1} parent=1 // pred_check_branch
      %20 = sbr.rel (0) target = $region17
    $region16: #{_projector_call.1} parent=1 // pred_region
      %s22 = ssub.s32 1024, 1024
      %23 = vsyncadd [#allocation3], %s22
      %s24 = sshll.u32 [#allocation2], 4
      %s25 = int_to_ptr.vmem [resolvable:$true] %s24
      %30 = dma.hbm_to_vmem [thread:$0]  %s3, 1024, %s25, [#allocation3], 64, 64, 4
    $region17: #{_projector_call.1} parent=1 // pred_fallthru
      _
    // Predicated region
    $region18: #{_projector_call.1} parent=1 // pred_check
      _
    $region19: #{_projector_call.1} parent=1 // pred_check_branch
      %32 = sbr.rel (0) target = $region21
    $region20: #{_projector_call.1} parent=1 // pred_region
      _
    $region21: #{_projector_call.1} parent=1 // pred_fallthru
      _
    // Predicated region
    $region22: #{_projector_call.1} parent=1 // pred_check
      _
    $region23: #{_projector_call.1} parent=1 // pred_check_branch
      %34 = sbr.rel (0) target = $region25
    $region24: #{_projector_call.1} parent=1 // pred_region
      _
    $region25: #{_projector_call.1} parent=1 // pred_fallthru
      _
    // Predicated region
    $region26: #{_projector_call.1} parent=1 // pred_check
      _
    $region27: #{_projector_call.1} parent=1 // pred_check_branch
      %36 = sbr.rel (0) target = $region29
    $region28: #{_projector_call.1} parent=1 // pred_region
      %37 = dma.done [#allocation3], 1024
    $region29: #{_projector_call.1} parent=1 // pred_fallthru
      _
    %v39 = vld [vmem:[%s0] sm:$0x1]
    %v40 = vld [vmem:[%s1] sm:$0xf]
    %v41 = vld [vmem:[%s1 + $0x4] sm:$0xf]
    %v42 = vld [vmem:[%s1 + $0x8] sm:$0xf]
    %v43 = vld [vmem:[%s1 + $0xc] sm:$0xf]
    %v44 = vld [vmem:[%s1 + $0x10] sm:$0xf]
    %v45 = vld [vmem:[%s1 + $0x14] sm:$0xf]
    %v46 = vld [vmem:[%s1 + $0x18] sm:$0xf]
    %v47 = vld [vmem:[%s1 + $0x1c] sm:$0xf]
    %v48 = vld [vmem:[%s1 + $0x20] sm:$0xf]
    %v49 = vld [vmem:[%s1 + $0x24] sm:$0xf]
    %v50 = vld [vmem:[%s1 + $0x28] sm:$0xf]
    %v51 = vld [vmem:[%s1 + $0x2c] sm:$0xf]
    %v52 = vld [vmem:[%s1 + $0x30] sm:$0xf]
    %v53 = vld [vmem:[%s1 + $0x34] sm:$0xf]
    %v54 = vld [vmem:[%s1 + $0x38] sm:$0xf]
    %v55 = vld [vmem:[%s1 + $0x3c] sm:$0xf]
    %v56 = vld [vmem:[%s2] sm:$0x1]
    %v58 = vlaneseq
    %v59 = vshrl.u32 %v58, 7
    %v60 = vsub.s32 0, %v59
    %v61 = vrot.slane %v56, %v60
    %v79 = vunpack.c.l.b16 %v40
    %v80 = vunpack.c.l.b16 %v41
    %v81 = vunpack.c.l.b16 %v42
    %v82 = vunpack.c.l.b16 %v43
    %v83 = vunpack.c.l.b16 %v44
    %v84 = vunpack.c.l.b16 %v45
    %v85 = vunpack.c.l.b16 %v46
    %v86 = vunpack.c.l.b16 %v47
    %v87 = vunpack.c.l.b16 %v48
    %v88 = vunpack.c.l.b16 %v49
    %v89 = vunpack.c.l.b16 %v50
    %v90 = vunpack.c.l.b16 %v51
    %v91 = vunpack.c.l.b16 %v52
    %v92 = vunpack.c.l.b16 %v53
    %v93 = vunpack.c.l.b16 %v54
    %v94 = vunpack.c.l.b16 %v55
    %v95 = vpack.c.b16 %v80, %v79
    %v96 = vpack.c.b16 %v82, %v81
    %v97 = vpack.c.b16 %v84, %v83
    %v98 = vpack.c.b16 %v86, %v85
    %v99 = vpack.c.b16 %v88, %v87
    %v100 = vpack.c.b16 %v90, %v89
    %v101 = vpack.c.b16 %v92, %v91
    %v102 = vpack.c.b16 %v94, %v93
    %111 = vmatprep.subr.bf16.mxu0 0
    %112 = vmatpush1.bf16.msra.mxu0 %v95
    %113 = vmatprep.subr.bf16.mxu0 0
    %114 = vmatpush1.bf16.msra.mxu0 %v96
    %115 = vmatprep.subr.bf16.mxu0 0
    %116 = vmatpush1.bf16.msra.mxu0 %v97
    %117 = vmatprep.subr.bf16.mxu0 0
    %118 = vmatpush1.bf16.msra.mxu0 %v98
    %119 = vmatprep.subr.bf16.mxu0 0
    %120 = vmatpush1.bf16.msra.mxu0 %v99
    %121 = vmatprep.subr.bf16.mxu0 0
    %122 = vmatpush1.bf16.msra.mxu0 %v100
    %123 = vmatprep.subr.bf16.mxu0 0
    %124 = vmatpush1.bf16.msra.mxu0 %v101
    %125 = vmatprep.subr.bf16.mxu0 0
    %126 = vmatpush1.bf16.msra.mxu0 %v102
    %127 = vmatprep.subr.bf16.mxu0 0
    %128 = vmatpush1.bf16.msra.mxu0 0
    %129 = vmatprep.subr.bf16.mxu0 0
    %130 = vmatpush1.bf16.msra.mxu0 0
    %131 = vmatprep.subr.bf16.mxu0 0
    %132 = vmatpush1.bf16.msra.mxu0 0
    %133 = vmatprep.subr.bf16.mxu0 0
    %134 = vmatpush1.bf16.msra.mxu0 0
    %135 = vmatprep.subr.bf16.mxu0 0
    %136 = vmatpush1.bf16.msra.mxu0 0
    %137 = vmatprep.subr.bf16.mxu0 0
    %138 = vmatpush1.bf16.msra.mxu0 0
    %139 = vmatprep.subr.bf16.mxu0 0
    %140 = vmatpush1.bf16.msra.mxu0 0
    %141 = vmatprep.subr.bf16.mxu0 0
    %142 = vmatpush1.bf16.msra.mxu0 0
    %143 = vmatprep.mubr.bf16.mxu0 0
    %144 = vmatmul.mubr.bf16.gmra.mrb[0].mxu0 %v39
    %v145 = vpop.f32.mrb[0].mxu0
    %v146 = vadd.f32 %v61, %v145
    %v147 = vpop.f32.mrb[0].mxu0
    %v148 = vpop.f32.mrb[0].mxu0
    %v149 = vpop.f32.mrb[0].mxu0
    %150 = vdwg.mxu0
    %v151 = vmax.f32 %v146, 0.0
    %v152 = vpack.c.bf16 %v151, %v151
    %v153 = vld [vmem:[#allocation2] sm:$0xf]
    %v154 = vld [vmem:[#allocation2 + $0x4] sm:$0xf]
    %v155 = vld [vmem:[#allocation2 + $0x8] sm:$0xf]
    %v156 = vld [vmem:[#allocation2 + $0xc] sm:$0xf]
    %v157 = vld [vmem:[#allocation2 + $0x10] sm:$0xf]
    %v158 = vld [vmem:[#allocation2 + $0x14] sm:$0xf]
    %v159 = vld [vmem:[#allocation2 + $0x18] sm:$0xf]
    %v160 = vld [vmem:[#allocation2 + $0x1c] sm:$0xf]
    %v161 = vld [vmem:[#allocation2 + $0x20] sm:$0xf]
    %v162 = vld [vmem:[#allocation2 + $0x24] sm:$0xf]
    %v163 = vld [vmem:[#allocation2 + $0x28] sm:$0xf]
    %v164 = vld [vmem:[#allocation2 + $0x2c] sm:$0xf]
    %v165 = vld [vmem:[#allocation2 + $0x30] sm:$0xf]
    %v166 = vld [vmem:[#allocation2 + $0x34] sm:$0xf]
    %v167 = vld [vmem:[#allocation2 + $0x38] sm:$0xf]
    %v168 = vld [vmem:[#allocation2 + $0x3c] sm:$0xf]
    %v169 = vld [vmem:[%s4] sm:$0x1]
    %v171 = vlaneseq
    %v172 = vshrl.u32 %v171, 7
    %v173 = vsub.s32 0, %v172
    %v174 = vrot.slane %v169, %v173
    %v192 = vunpack.c.l.b16 %v153
    %v193 = vunpack.c.l.b16 %v154
    %v194 = vunpack.c.l.b16 %v155
    %v195 = vunpack.c.l.b16 %v156
    %v196 = vunpack.c.l.b16 %v157
    %v197 = vunpack.c.l.b16 %v158
    %v198 = vunpack.c.l.b16 %v159
    %v199 = vunpack.c.l.b16 %v160
    %v200 = vunpack.c.l.b16 %v161
    %v201 = vunpack.c.l.b16 %v162
    %v202 = vunpack.c.l.b16 %v163
    %v203 = vunpack.c.l.b16 %v164
    %v204 = vunpack.c.l.b16 %v165
    %v205 = vunpack.c.l.b16 %v166
    %v206 = vunpack.c.l.b16 %v167
    %v207 = vunpack.c.l.b16 %v168
    %v208 = vpack.c.b16 %v193, %v192
    %v209 = vpack.c.b16 %v195, %v194
    %v210 = vpack.c.b16 %v197, %v196
    %v211 = vpack.c.b16 %v199, %v198
    %v212 = vpack.c.b16 %v201, %v200
    %v213 = vpack.c.b16 %v203, %v202
    %v214 = vpack.c.b16 %v205, %v204
    %v215 = vpack.c.b16 %v207, %v206
    %224 = vmatprep.subr.bf16.mxu0 0
    %225 = vmatpush1.bf16.msra.mxu0 %v208
    %226 = vmatprep.subr.bf16.mxu0 0
    %227 = vmatpush1.bf16.msra.mxu0 %v209
    %228 = vmatprep.subr.bf16.mxu0 0
    %229 = vmatpush1.bf16.msra.mxu0 %v210
    %230 = vmatprep.subr.bf16.mxu0 0
    %231 = vmatpush1.bf16.msra.mxu0 %v211
    %232 = vmatprep.subr.bf16.mxu0 0
    %233 = vmatpush1.bf16.msra.mxu0 %v212
    %234 = vmatprep.subr.bf16.mxu0 0
    %235 = vmatpush1.bf16.msra.mxu0 %v213
    %236 = vmatprep.subr.bf16.mxu0 0
    %237 = vmatpush1.bf16.msra.mxu0 %v214
    %238 = vmatprep.subr.bf16.mxu0 0
    %239 = vmatpush1.bf16.msra.mxu0 %v215
    %240 = vmatprep.subr.bf16.mxu0 0
    %241 = vmatpush1.bf16.msra.mxu0 0
    %242 = vmatprep.subr.bf16.mxu0 0
    %243 = vmatpush1.bf16.msra.mxu0 0
    %244 = vmatprep.subr.bf16.mxu0 0
    %245 = vmatpush1.bf16.msra.mxu0 0
    %246 = vmatprep.subr.bf16.mxu0 0
    %247 = vmatpush1.bf16.msra.mxu0 0
    %248 = vmatprep.subr.bf16.mxu0 0
    %249 = vmatpush1.bf16.msra.mxu0 0
    %250 = vmatprep.subr.bf16.mxu0 0
    %251 = vmatpush1.bf16.msra.mxu0 0
    %252 = vmatprep.subr.bf16.mxu0 0
    %253 = vmatpush1.bf16.msra.mxu0 0
    %254 = vmatprep.subr.bf16.mxu0 0
    %255 = vmatpush1.bf16.msra.mxu0 0
    %256 = vmatprep.mubr.bf16.mxu0 0
    %257 = vmatmul.mubr.bf16.gmra.mrb[0].mxu0 %v152
    %v258 = vpop.f32.mrb[0].mxu0
    %v259 = vadd.f32 %v174, %v258
    %v260 = vpop.f32.mrb[0].mxu0
    %v261 = vpop.f32.mrb[0].mxu0
    %v262 = vpop.f32.mrb[0].mxu0
    %263 = vdwg.mxu0
    %v264 = vmax.f32 %v259, 0.0
    %v265 = vpack.c.bf16 %v264, %v264
    %v266 = vld [vmem:[%s5] sm:$0xf]
    %v267 = vld [vmem:[%s5 + $0x4] sm:$0xf]
    %v268 = vld [vmem:[%s5 + $0x8] sm:$0xf]
    %v269 = vld [vmem:[%s5 + $0xc] sm:$0xf]
    %v270 = vld [vmem:[%s5 + $0x10] sm:$0xf]
    %v271 = vld [vmem:[%s5 + $0x14] sm:$0xf]
    %v272 = vld [vmem:[%s5 + $0x18] sm:$0xf]
    %v273 = vld [vmem:[%s5 + $0x1c] sm:$0xf]
    %v274 = vld [vmem:[%s5 + $0x20] sm:$0xf]
    %v275 = vld [vmem:[%s5 + $0x24] sm:$0xf]
    %v276 = vld [vmem:[%s5 + $0x28] sm:$0xf]
    %v277 = vld [vmem:[%s5 + $0x2c] sm:$0xf]
    %v278 = vld [vmem:[%s5 + $0x30] sm:$0xf]
    %v279 = vld [vmem:[%s5 + $0x34] sm:$0xf]
    %v280 = vld [vmem:[%s5 + $0x38] sm:$0xf]
    %v281 = vld [vmem:[%s5 + $0x3c] sm:$0xf]
    %v298 = vunpack.c.l.b16 %v266
    %v299 = vunpack.c.l.b16 %v267
    %v300 = vunpack.c.l.b16 %v268
    %v301 = vunpack.c.l.b16 %v269
    %v302 = vunpack.c.l.b16 %v270
    %v303 = vunpack.c.l.b16 %v271
    %v304 = vunpack.c.l.b16 %v272
    %v305 = vunpack.c.l.b16 %v273
    %v306 = vunpack.c.l.b16 %v274
    %v307 = vunpack.c.l.b16 %v275
    %v308 = vunpack.c.l.b16 %v276
    %v309 = vunpack.c.l.b16 %v277
    %v310 = vunpack.c.l.b16 %v278
    %v311 = vunpack.c.l.b16 %v279
    %v312 = vunpack.c.l.b16 %v280
    %v313 = vunpack.c.l.b16 %v281
    %v314 = vpack.c.b16 %v299, %v298
    %v315 = vpack.c.b16 %v301, %v300
    %v316 = vpack.c.b16 %v303, %v302
    %v317 = vpack.c.b16 %v305, %v304
    %v318 = vpack.c.b16 %v307, %v306
    %v319 = vpack.c.b16 %v309, %v308
    %v320 = vpack.c.b16 %v311, %v310
    %v321 = vpack.c.b16 %v313, %v312
    %330 = vmatprep.subr.bf16.mxu0 0
    %331 = vmatpush1.bf16.msra.mxu0 %v314
    %332 = vmatprep.subr.bf16.mxu0 0
    %333 = vmatpush1.bf16.msra.mxu0 %v315
    %334 = vmatprep.subr.bf16.mxu0 0
    %335 = vmatpush1.bf16.msra.mxu0 %v316
    %336 = vmatprep.subr.bf16.mxu0 0
    %337 = vmatpush1.bf16.msra.mxu0 %v317
    %338 = vmatprep.subr.bf16.mxu0 0
    %339 = vmatpush1.bf16.msra.mxu0 %v318
    %340 = vmatprep.subr.bf16.mxu0 0
    %341 = vmatpush1.bf16.msra.mxu0 %v319
    %342 = vmatprep.subr.bf16.mxu0 0
    %343 = vmatpush1.bf16.msra.mxu0 %v320
    %344 = vmatprep.subr.bf16.mxu0 0
    %345 = vmatpush1.bf16.msra.mxu0 %v321
    %346 = vmatprep.subr.bf16.mxu0 0
    %347 = vmatpush1.bf16.msra.mxu0 0
    %348 = vmatprep.subr.bf16.mxu0 0
    %349 = vmatpush1.bf16.msra.mxu0 0
    %350 = vmatprep.subr.bf16.mxu0 0
    %351 = vmatpush1.bf16.msra.mxu0 0
    %352 = vmatprep.subr.bf16.mxu0 0
    %353 = vmatpush1.bf16.msra.mxu0 0
    %354 = vmatprep.subr.bf16.mxu0 0
    %355 = vmatpush1.bf16.msra.mxu0 0
    %356 = vmatprep.subr.bf16.mxu0 0
    %357 = vmatpush1.bf16.msra.mxu0 0
    %358 = vmatprep.subr.bf16.mxu0 0
    %359 = vmatpush1.bf16.msra.mxu0 0
    %360 = vmatprep.subr.bf16.mxu0 0
    %361 = vmatpush1.bf16.msra.mxu0 0
    %362 = vmatprep.mubr.bf16.mxu0 0
    %363 = vmatmul.mubr.bf16.gmra.mrb[0].mxu0 %v265
    %v364 = vpop.f32.mrb[0].mxu0
    %v365 = vadd.f32 0.0, %v364
    %v366 = vpop.f32.mrb[0].mxu0
    %v367 = vpop.f32.mrb[0].mxu0
    %v368 = vpop.f32.mrb[0].mxu0
    %369 = vdwg.mxu0
    %vm370 = vcmask 25600
    %371 = vst.msk [vmem:[#allocation5] sm:$0x3] %vm370, %v365
    // Predicated region
    $region30: #{_projector_call.1} parent=1 // pred_check
      _
    $region31: #{_projector_call.1} parent=1 // pred_check_branch
      %373 = sbr.rel (0) target = $region33
    $region32: #{_projector_call.1} parent=1 // pred_region
      %s375 = ssub.s32 32, 32
      %376 = vsyncadd [#allocation4], %s375
      %s378 = sshll.u32 [#allocation5], 4
      %s379 = int_to_ptr.vmem [resolvable:$true] %s378
      %381 = dma.vmem_to_hbm [thread:$0]  %s379, 32, %s6, [#allocation4]
    $region33: #{_projector_call.1} parent=1 // pred_fallthru
      _
    // Predicated region
    $region34: #{_projector_call.1} parent=1 // pred_check
      _
    $region35: #{_projector_call.1} parent=1 // pred_check_branch
      %383 = sbr.rel (0) target = $region37
    $region36: #{_projector_call.1} parent=1 // pred_region
      %384 = dma.done [#allocation4], 32
    $region37: #{_projector_call.1} parent=1 // pred_fallthru
      _
    %385 = vsyncpa [#allocation3], 1
    %386 = vsyncpa [#allocation4], 1

</llo_original>
